<compile_context>
chip_gen: v6e
topology: v6e:2x2x1
jax: 0.10.0
libtpu: 0.0.40
codegen_flags: <defaults>
</compile_context>

<pallas_src>
import functools

import jax
import jax.numpy as jnp
from jax import lax
from jax.experimental import pallas as pl
from jax.experimental.pallas import tpu as pltpu

GAMMA = 2.0
ALPHA = 0.25
_LANES = 128
_MAX_TILE_ROWS = 512  # 512 * 128 * 4B = 256 KiB per buffer -> safe on all gens


def _round_up(x, m):
    return ((x + m - 1) // m) * m


def _focal_loss_kernel(x_ref, t_ref, w_ref, o_ref, *, gamma, alpha,
                       weight_cols, classes):
    # x_ref/t_ref/o_ref: (tile_rows, 128) lane-dense tiles.
    # w_ref: (tile_rows, weight_cols); weight_cols == 128 means per-element
    #        weights, otherwise one weight per anchor (F = 128 // classes).
    x = x_ref[...]
    t = t_ref[...]
    if x.dtype != jnp.float32:
        x = x.astype(jnp.float32)
    if t.dtype != jnp.float32:
        t = t.astype(jnp.float32)

    # One shared transcendental: e = exp(-|x|).
    #   sigmoid(x) = 1/(1+e)   if x >= 0
    #              = e/(1+e)   if x <  0
    #   bce        = max(x, 0) - x*t + log1p(e)
    e = jnp.exp(-jnp.abs(x))
    inv = pl.reciprocal(1.0 + e, approx=False)
    pred_sigmoid = jnp.where(x >= 0.0, inv, e * inv)

    alpha_weight = t * alpha + (1.0 - t) * (1.0 - alpha)
    pt = t * (1.0 - pred_sigmoid) + (1.0 - t) * pred_sigmoid

    # Static (trace-time) specialization of pt ** gamma (gamma is a Python
    # float here): gamma == 2 becomes a plain VPU multiply instead of the
    # EUP-heavy exp(gamma * log(pt)) that jnp.power lowers to.
    if gamma == 2.0:
        pt_pow = pt * pt
    elif gamma == 1.0:
        pt_pow = pt
    elif float(gamma).is_integer() and 0.0 < gamma <= 4.0:
        pt_pow = pt
        for _ in range(int(gamma) - 1):
            pt_pow = pt_pow * pt
    else:
        pt_pow = jnp.power(pt, gamma)

    bce = jnp.maximum(x, 0.0) - x * t + jnp.log1p(e)
    loss = alpha_weight * pt_pow * bce

    w = w_ref[...]
    if w.dtype != jnp.float32:
        w = w.astype(jnp.float32)

    n_lanes = x.shape[-1]
    if weight_cols < n_lanes:
        # Expand per-anchor weights (tile_rows, F) to per-element lane weights
        # (tile_rows, 128) with a tiny MXU matmul:
        #   E[k, l] = 1  iff  k*classes <= l < (k+1)*classes   (i.e. l//C == k)
        k_idx = lax.broadcasted_iota(jnp.int32, (weight_cols, n_lanes), 0)
        l_idx = lax.broadcasted_iota(jnp.int32, (weight_cols, n_lanes), 1)
        expand = jnp.logical_and(l_idx >= k_idx * classes,
                                 l_idx < (k_idx + 1) * classes
                                 ).astype(jnp.float32)
        w = jnp.dot(w, expand, preferred_element_type=jnp.float32)

    o_ref[...] = (loss * w).astype(o_ref.dtype)


def _launch(x2, t2, w2, *, gamma, alpha, classes, out_dtype):
    rows, n_lanes = x2.shape
    weight_cols = w2.shape[1]

    tile_rows = min(_MAX_TILE_ROWS, _round_up(rows, 8))
    rows_p = _round_up(rows, tile_rows)
    if rows_p != rows:
        x2 = jnp.pad(x2, ((0, rows_p - rows), (0, 0)))
        t2 = jnp.pad(t2, ((0, rows_p - rows), (0, 0)))
        w2 = jnp.pad(w2, ((0, rows_p - rows), (0, 0)))

    kernel = functools.partial(_focal_loss_kernel, gamma=gamma, alpha=alpha,
                               weight_cols=weight_cols, classes=classes)

    out = pl.pallas_call(
        kernel,
        out_shape=jax.ShapeDtypeStruct((rows_p, n_lanes), out_dtype),
        grid_spec=pltpu.PrefetchScalarGridSpec(
            num_scalar_prefetch=0,
            grid=(rows_p // tile_rows,),
            in_specs=[
                pl.BlockSpec((tile_rows, n_lanes), lambda i: (i, 0)),
                pl.BlockSpec((tile_rows, n_lanes), lambda i: (i, 0)),
                pl.BlockSpec((tile_rows, weight_cols), lambda i: (i, 0)),
            ],
            out_specs=pl.BlockSpec((tile_rows, n_lanes), lambda i: (i, 0)),
        ),
        compiler_params=pltpu.CompilerParams(
            dimension_semantics=("parallel",)),
    )(x2, t2, w2)

    if rows_p != rows:
        out = out[:rows]
    return out


def sigmoid_focal_classification_loss(logits, targets, weights,
                                      gamma=GAMMA, alpha=ALPHA):
    """logits/targets: (B, P, C) float; weights: (B, P) float.
    Returns weighted per-element focal loss of shape (B, P, C)."""
    B, P, C = logits.shape
    assert targets.shape == (B, P, C)
    assert weights.shape == (B, P)
    out_dtype = logits.dtype

    if _LANES % C == 0 and P % (_LANES // C) == 0:
        # Fast path: pack F = 128/C anchors per 128-lane row (free reshape,
        # row-major); weights stay compressed as (rows, F) and are expanded
        # in-kernel on the MXU.
        f = _LANES // C
        rows = (B * P) // f
        x2 = logits.reshape(rows, _LANES)
        t2 = targets.reshape(rows, _LANES)
        w2 = weights.reshape(rows, f)
        out2 = _launch(x2, t2, w2, gamma=gamma, alpha=alpha, classes=C,
                       out_dtype=out_dtype)
        return out2.reshape(B, P, C)

    # Generic fallback (C does not divide 128, or P not a multiple of 128/C):
    # expand the weights in the wrapper and run the same lane-dense
    # elementwise kernel on the flattened, padded arrays.
    n = B * P * C
    rows = pl.cdiv(n, _LANES)
    pad = rows * _LANES - n
    w_full = jnp.broadcast_to(weights[:, :, None], (B, P, C))

    def _flat(a):
        a = a.reshape(-1)
        if pad:
            a = jnp.pad(a, (0, pad))
        return a.reshape(rows, _LANES)

    out2 = _launch(_flat(logits), _flat(targets), _flat(w_full),
                   gamma=gamma, alpha=alpha, classes=C, out_dtype=out_dtype)
    return out2.reshape(-1)[:n].reshape(B, P, C)


def _reference(logits, targets, weights, gamma=GAMMA, alpha=ALPHA):
    p = jax.nn.sigmoid(logits)
    alpha_w = targets * alpha + (1.0 - targets) * (1.0 - alpha)
    pt = targets * (1.0 - p) + (1.0 - targets) * p
    focal_w = alpha_w * jnp.power(pt, gamma)
    bce = (jnp.maximum(logits, 0.0) - logits * targets
           + jnp.log1p(jnp.exp(-jnp.abs(logits))))
    return focal_w * bce * weights[..., None]


if __name__ == "__main__":
    key = jax.random.PRNGKey(0)
    k1, k2, k3 = jax.random.split(key, 3)

    # --- Fast (lane-dense) path: C divides 128 -------------------------------
    B, P, C = 2, 128, 8  # batch, proposals, classes
    logits = jax.random.normal(k1, (B, P, C), dtype=jnp.float32) * 3.0
    cls = jax.random.randint(k2, (B, P), 0, C)
    targets = jax.nn.one_hot(cls, C, dtype=jnp.float32)
    weights = jax.random.uniform(k3, (B, P), dtype=jnp.float32)

    out = sigmoid_focal_classification_loss(logits, targets, weights)
    out = jax.block_until_ready(out)
    ref = _reference(logits, targets, weights)
    assert out.shape == (B, P, C)
    assert jnp.allclose(out, ref, atol=1e-5, rtol=1e-5), (
        float(jnp.max(jnp.abs(out - ref))))

    # --- Generic fallback path: C does not divide 128 -------------------------
    B2, P2, C2 = 2, 12, 3
    k4, k5, k6 = jax.random.split(jax.random.PRNGKey(1), 3)
    logits2 = jax.random.normal(k4, (B2, P2, C2), dtype=jnp.float32) * 3.0
    cls2 = jax.random.randint(k5, (B2, P2), 0, C2)
    targets2 = jax.nn.one_hot(cls2, C2, dtype=jnp.float32)
    weights2 = jax.random.uniform(k6, (B2, P2), dtype=jnp.float32)

    out2 = sigmoid_focal_classification_loss(logits2, targets2, weights2)
    out2 = jax.block_until_ready(out2)
    ref2 = _reference(logits2, targets2, weights2)
    assert out2.shape == (B2, P2, C2)
    assert jnp.allclose(out2, ref2, atol=1e-5, rtol=1e-5), (
        float(jnp.max(jnp.abs(out2 - ref2))))

    print("KERNEL_OK")
</pallas_src>

<mosaic_0001>
module attributes {stable_mosaic.version = 11 : i64} {
  func.func @_focal_loss_kernel(%arg0: i32, %arg1: memref<16x128xf32, #tpu.memory_space<vmem>>, %arg2: memref<16x128xf32, #tpu.memory_space<vmem>>, %arg3: memref<16x16xf32, #tpu.memory_space<vmem>>, %arg4: memref<16x128xf32, #tpu.memory_space<vmem>>) attributes {dimension_semantics = [#tpu.dimension_semantics<parallel>], iteration_bounds = array<i64: 1>, scalar_prefetch = 0 : i64, scratch_operands = 0 : i64, tpu.core_type = #tpu.core_type<tc>, window_params = [{transform_indices = @transform_0, window_bounds = array<i64: 16, 128>}, {transform_indices = @transform_1, window_bounds = array<i64: 16, 128>}, {transform_indices = @transform_2, window_bounds = array<i64: 16, 16>}, {transform_indices = @transform_3, window_bounds = array<i64: 16, 128>}]} {
    %c0 = arith.constant 0 : index
    %c0_0 = arith.constant 0 : index
    %0 = vector.load %arg1[%c0, %c0_0] : memref<16x128xf32, #tpu.memory_space<vmem>>, vector<16x128xf32>
    %c0_1 = arith.constant 0 : index
    %c0_2 = arith.constant 0 : index
    %1 = vector.load %arg2[%c0_1, %c0_2] : memref<16x128xf32, #tpu.memory_space<vmem>>, vector<16x128xf32>
    %2 = math.absf %0 : vector<16x128xf32>
    %cst = arith.constant 0.000000e+00 : f32
    %3 = vector.broadcast %cst : f32 to vector<16x128xf32>
    %4 = arith.subf %3, %2 : vector<16x128xf32>
    %5 = math.exp %4 : vector<16x128xf32>
    %cst_3 = arith.constant 1.000000e+00 : f32
    %6 = vector.broadcast %cst_3 : f32 to vector<16x128xf32>
    %7 = arith.addf %6, %5 : vector<16x128xf32>
    %8 = tpu.reciprocal %7 : vector<16x128xf32> -> vector<16x128xf32>
    %cst_4 = arith.constant 0.000000e+00 : f32
    %9 = vector.broadcast %cst_4 : f32 to vector<16x128xf32>
    %10 = arith.cmpf oge, %0, %9 : vector<16x128xf32>
    %11 = arith.mulf %5, %8 : vector<16x128xf32>
    %12 = arith.select %10, %8, %11 : vector<16x128xi1>, vector<16x128xf32>
    %cst_5 = arith.constant 2.500000e-01 : f32
    %13 = vector.broadcast %cst_5 : f32 to vector<16x128xf32>
    %14 = arith.mulf %1, %13 : vector<16x128xf32>
    %cst_6 = arith.constant 1.000000e+00 : f32
    %15 = vector.broadcast %cst_6 : f32 to vector<16x128xf32>
    %16 = arith.subf %15, %1 : vector<16x128xf32>
    %cst_7 = arith.constant 7.500000e-01 : f32
    %17 = vector.broadcast %cst_7 : f32 to vector<16x128xf32>
    %18 = arith.mulf %16, %17 : vector<16x128xf32>
    %19 = arith.addf %14, %18 : vector<16x128xf32>
    %cst_8 = arith.constant 1.000000e+00 : f32
    %20 = vector.broadcast %cst_8 : f32 to vector<16x128xf32>
    %21 = arith.subf %20, %12 : vector<16x128xf32>
    %22 = arith.mulf %1, %21 : vector<16x128xf32>
    %cst_9 = arith.constant 1.000000e+00 : f32
    %23 = vector.broadcast %cst_9 : f32 to vector<16x128xf32>
    %24 = arith.subf %23, %1 : vector<16x128xf32>
    %25 = arith.mulf %24, %12 : vector<16x128xf32>
    %26 = arith.addf %22, %25 : vector<16x128xf32>
    %27 = arith.mulf %26, %26 : vector<16x128xf32>
    %cst_10 = arith.constant 0.000000e+00 : f32
    %28 = vector.broadcast %cst_10 : f32 to vector<16x128xf32>
    %29 = arith.maximumf %0, %28 : vector<16x128xf32>
    %30 = arith.mulf %0, %1 : vector<16x128xf32>
    %31 = arith.subf %29, %30 : vector<16x128xf32>
    %32 = math.log1p %5 : vector<16x128xf32>
    %33 = arith.addf %31, %32 : vector<16x128xf32>
    %34 = arith.mulf %19, %27 : vector<16x128xf32>
    %35 = arith.mulf %34, %33 : vector<16x128xf32>
    %c0_11 = arith.constant 0 : index
    %c0_12 = arith.constant 0 : index
    %36 = vector.load %arg3[%c0_11, %c0_12] : memref<16x16xf32, #tpu.memory_space<vmem>>, vector<16x16xf32>
    %37 = tpu.iota {dimensions = array<i32: 0>} : vector<16x128xi32>
    %38 = tpu.iota {dimensions = array<i32: 1>} : vector<16x128xi32>
    %c8_i32 = arith.constant 8 : i32
    %39 = vector.broadcast %c8_i32 : i32 to vector<16x128xi32>
    %40 = arith.muli %37, %39 : vector<16x128xi32>
    %41 = arith.cmpi sge, %38, %40 : vector<16x128xi32>
    %c1_i32 = arith.constant 1 : i32
    %42 = vector.broadcast %c1_i32 : i32 to vector<16x128xi32>
    %43 = arith.addi %37, %42 : vector<16x128xi32>
    %c8_i32_13 = arith.constant 8 : i32
    %44 = vector.broadcast %c8_i32_13 : i32 to vector<16x128xi32>
    %45 = arith.muli %43, %44 : vector<16x128xi32>
    %46 = arith.cmpi slt, %38, %45 : vector<16x128xi32>
    %47 = arith.andi %41, %46 : vector<16x128xi1>
    %48 = arith.extui %47 : vector<16x128xi1> to vector<16x128xi32>
    %49 = arith.sitofp %48 : vector<16x128xi32> to vector<16x128xf32>
    %cst_14 = arith.constant dense<0.000000e+00> : vector<16x128xf32>
    %50 = tpu.matmul %36, %49, %cst_14 {dimension_numbers = #tpu.dot_dimension_numbers<[1], [0], [0], [1], [0, 0, 1, 1], [], []>} : vector<16x16xf32>, vector<16x128xf32>, vector<16x128xf32> -> vector<16x128xf32>
    %51 = arith.mulf %35, %50 : vector<16x128xf32>
    %c0_15 = arith.constant 0 : index
    %c0_16 = arith.constant 0 : index
    %52 = vector.load %arg4[%c0_15, %c0_16] : memref<16x128xf32, #tpu.memory_space<vmem>>, vector<16x128xf32>
    tpu.vector_store %arg4[%c0_15, %c0_16], %51 {strides = array<i32>} : memref<16x128xf32, #tpu.memory_space<vmem>>, vector<16x128xf32>,
    return
  }
  func.func @transform_0(%arg0: i32) -> (i32, i32) {
    %c0_i32 = arith.constant 0 : i32
    %c0_i32_0 = arith.constant 0 : i32
    return %arg0, %c0_i32 : i32, i32
  }
  func.func @transform_1(%arg0: i32) -> (i32, i32) {
    %c0_i32 = arith.constant 0 : i32
    %c0_i32_0 = arith.constant 0 : i32
    return %arg0, %c0_i32 : i32, i32
  }
  func.func @transform_2(%arg0: i32) -> (i32, i32) {
    %c0_i32 = arith.constant 0 : i32
    %c0_i32_0 = arith.constant 0 : i32
    return %arg0, %c0_i32 : i32, i32
  }
  func.func @transform_3(%arg0: i32) -> (i32, i32) {
    %c0_i32 = arith.constant 0 : i32
    %c0_i32_0 = arith.constant 0 : i32
    return %arg0, %c0_i32 : i32, i32
  }
}

</mosaic_0001>

<llo_original>
// kernel: tpu_custom_call.1
$region0: #{tpu_custom_call.1}
  #allocation0 [shape = 'u32[]', space=smem, size = 0x4, offset = 0x4, fixed_abs, tag = 'smem constant byte address 0x4 - core index']
  #allocation1 [shape = 'u32[144,128]{1,0:T(1,128)}', space=vmem, size = 0x12000, scoped, tag = 'internal scratch']
  %s0 = inlined_call_operand.hbm [shape: f32[16,128], index: 0, kind: input, shape index: {}]
  %s1 = inlined_call_operand.hbm [shape: f32[16,128], index: 1, kind: input, shape index: {}]
  %s2 = inlined_call_operand.hbm [shape: f32[16,16], index: 2, kind: input, shape index: {}]
  %s3 = inlined_call_operand.hbm [shape: f32[16,128], index: 3, kind: output, shape index: {}]
  %s4 = sld [smem:[#allocation0]]
  $region34: #{tpu_custom_call.1} parent=0
    _
  %s6 = ssub.s32 1, %s4
  %s7 = scalar_select 0, %s6, %s4
  $region1: #{tpu_custom_call.1} parent=0
    #allocation2 [shape = 'u8[8192]{0}', space=vmem, size = 0x2000, scoped, tag = 'input window, operand 0, single buffered']
    #allocation3 [shape = 's32[1]{0}', space=sflag, size = 0x4, scoped, tag = 'scoped memory for tpu_custom_call.1']
    #allocation4 [shape = 's32[1]{0}', space=sflag, size = 0x4, scoped, tag = 'scoped memory for tpu_custom_call.1']
    #allocation5 [shape = 'u8[8192]{0}', space=vmem, size = 0x2000, scoped, tag = 'input window, operand 1, single buffered']
    #allocation6 [shape = 's32[1]{0}', space=sflag, size = 0x4, scoped, tag = 'scoped memory for tpu_custom_call.1']
    #allocation7 [shape = 'u8[8192]{0}', space=vmem, size = 0x2000, scoped, tag = 'input window, operand 2, single buffered']
    #allocation8 [shape = 'u8[8192]{0}', space=vmem, size = 0x2000, scoped, tag = 'output window, operand 0, single buffered']
    %8 = vsyncpa [#allocation3], 0
    %9 = vsyncpa [#allocation6], 0
    %10 = vsyncpa [#allocation4], 0
    // Predicated region
    $region2: #{tpu_custom_call.1} parent=1 // pred_check
      _
    $region3: #{tpu_custom_call.1} parent=1 // pred_check_branch
      %12 = sbr.rel (0) target = $region5
    $region4: #{tpu_custom_call.1} parent=1 // pred_region
      %s14 = ssub.s32 256, 256
      %15 = vsyncadd [#allocation3], %s14
      %s16 = sshll.u32 [#allocation2], 4
      %s17 = int_to_ptr.vmem [resolvable:$true] %s16
      %22 = dma.hbm_to_vmem [thread:$0]  %s0, 256, %s17, [#allocation3], 128, 128, 8
    $region5: #{tpu_custom_call.1} parent=1 // pred_fallthru
      _
    // Predicated region
    $region6: #{tpu_custom_call.1} parent=1 // pred_check
      _
    $region7: #{tpu_custom_call.1} parent=1 // pred_check_branch
      %24 = sbr.rel (0) target = $region9
    $region8: #{tpu_custom_call.1} parent=1 // pred_region
      %s26 = ssub.s32 256, 256
      %27 = vsyncadd [#allocation6], %s26
      %s28 = sshll.u32 [#allocation5], 4
      %s29 = int_to_ptr.vmem [resolvable:$true] %s28
      %34 = dma.hbm_to_vmem [thread:$0]  %s1, 256, %s29, [#allocation6], 128, 128, 8
    $region9: #{tpu_custom_call.1} parent=1 // pred_fallthru
      _
    // Predicated region
    $region10: #{tpu_custom_call.1} parent=1 // pred_check
      _
    $region11: #{tpu_custom_call.1} parent=1 // pred_check_branch
      %36 = sbr.rel (0) target = $region13
    $region12: #{tpu_custom_call.1} parent=1 // pred_region
      %s38 = ssub.s32 256, 256
      %39 = vsyncadd [#allocation6], %s38
      %s40 = sshll.u32 [#allocation7], 4
      %s41 = int_to_ptr.vmem [resolvable:$true] %s40
      %46 = dma.hbm_to_vmem [thread:$0]  %s2, 256, %s41, [#allocation6], 128, 128, 8
    $region13: #{tpu_custom_call.1} parent=1 // pred_fallthru
      _
    // Predicated region
    $region14: #{tpu_custom_call.1} parent=1 // pred_check
      _
    $region15: #{tpu_custom_call.1} parent=1 // pred_check_branch
      %48 = sbr.rel (0) target = $region17
    $region16: #{tpu_custom_call.1} parent=1 // pred_region
      %49 = dma.done [#allocation3], 256
    $region17: #{tpu_custom_call.1} parent=1 // pred_fallthru
      _
    // Predicated region
    $region18: #{tpu_custom_call.1} parent=1 // pred_check
      _
    $region19: #{tpu_custom_call.1} parent=1 // pred_check_branch
      %51 = sbr.rel (0) target = $region21
    $region20: #{tpu_custom_call.1} parent=1 // pred_region
      %52 = dma.done [#allocation6], 256
    $region21: #{tpu_custom_call.1} parent=1 // pred_fallthru
      _
    // Predicated region
    $region22: #{tpu_custom_call.1} parent=1 // pred_check
      _
    $region23: #{tpu_custom_call.1} parent=1 // pred_check_branch
      %54 = sbr.rel (0) target = $region25
    $region24: #{tpu_custom_call.1} parent=1 // pred_region
      %55 = dma.done [#allocation6], 256
    $region25: #{tpu_custom_call.1} parent=1 // pred_fallthru
      _
    %v56 = vld [vmem:[#allocation2] sm:$0xff]
    %v57 = vld [vmem:[#allocation2 + $0x8] sm:$0xff]
    %v58 = vld [vmem:[#allocation5] sm:$0xff]
    %v59 = vld [vmem:[#allocation5 + $0x8] sm:$0xff]
    %v60 = vand.u32 2147483647, %v56
    %v61 = vand.u32 2147483647, %v57
    %v62 = vsub.f32 0.0, %v60
    %v63 = vsub.f32 0.0, %v61
    %v64 = vmul.f32 %v62, 1.442695
    %v65 = vpow.pop %v64
    %v66 = vmul.f32 %v63, 1.442695
    %v67 = vpow.pop %v66
    %v68 = vadd.f32 %v65, 1.0
    %v69 = vadd.f32 %v67, 1.0
    %v70 = vrcp.pop %v68
    %v71 = vrcp.pop %v69
    %vm72 = vcmp.ge.f32.partialorder %v56, 0.0
    %vm73 = vcmp.ge.f32.partialorder %v57, 0.0
    %v74 = vmul.f32 %v65, %v70
    %v75 = vmul.f32 %v67, %v71
    %v76 = vsel %vm72, %v70, %v74
    %v77 = vsel %vm73, %v71, %v75
    %v78 = vmul.f32 %v58, 0.25
    %v79 = vmul.f32 %v59, 0.25
    %v80 = vsub.f32 1.0, %v58
    %v81 = vsub.f32 1.0, %v59
    %v82 = vmul.f32 %v80, 0.75
    %v83 = vmul.f32 %v81, 0.75
    %v84 = vadd.f32 %v78, %v82
    %v85 = vadd.f32 %v79, %v83
    %v86 = vsub.f32 1.0, %v76
    %v87 = vsub.f32 1.0, %v77
    %v88 = vmul.f32 %v58, %v86
    %v89 = vmul.f32 %v59, %v87
    %v90 = vmul.f32 %v80, %v76
    %v91 = vmul.f32 %v81, %v77
    %v92 = vadd.f32 %v88, %v90
    %v93 = vadd.f32 %v89, %v91
    %v94 = vmul.f32 %v92, %v92
    %v95 = vmul.f32 %v93, %v93
    %v96 = vmax.f32 %v56, 0.0
    %v97 = vmax.f32 %v57, 0.0
    %v98 = vmul.f32 %v56, %v58
    %v99 = vmul.f32 %v57, %v59
    %v100 = vsub.f32 %v96, %v98
    %v101 = vsub.f32 %v97, %v99
    %v102 = vadd.f32 %v65, 1.0
    %v103 = vlog2.pop %v102
    %v104 = vmul.f32 %v103, 0.6931472
    %v105 = vmul.f32 -0.5, %v65
    %v106 = vadd.f32 %v105, 1.0
    %v107 = vmul.f32 %v106, %v65
    %v108 = vand.u32 2147483647, %v65
    %vm109 = vcmp.lt.f32.partialorder %v108, 0.0004427343
    %v110 = vsel %vm109, %v107, %v104
    %v111 = vadd.f32 %v67, 1.0
    %v112 = vlog2.pop %v111
    %v113 = vmul.f32 %v112, 0.6931472
    %v114 = vmul.f32 -0.5, %v67
    %v115 = vadd.f32 %v114, 1.0
    %v116 = vmul.f32 %v115, %v67
    %v117 = vand.u32 2147483647, %v67
    %vm118 = vcmp.lt.f32.partialorder %v117, 0.0004427343
    %v119 = vsel %vm118, %v116, %v113
    %v120 = vadd.f32 %v100, %v110
    %v121 = vadd.f32 %v101, %v119
    %v122 = vmul.f32 %v84, %v94
    %v123 = vmul.f32 %v85, %v95
    %v124 = vmul.f32 %v122, %v120
    %v125 = vmul.f32 %v123, %v121
    %v126 = vld [vmem:[#allocation7] sm:$0xff]
    %v127 = vld [vmem:[#allocation7 + $0x8] sm:$0xff]
    %v128 = vlaneseq
    %v129 = vshrl.u32 %v128, 7
    %v130 = vadd.s32 %v129, 8
    %v131 = vlaneseq
    %v132 = vand.u32 %v131, 127
    %v133 = vmul.u32 %v129, 8
    %v134 = vmul.u32 %v130, 8
    %vm135 = vcmp.ge.s32.totalorder %v132, %v133
    %vm136 = vcmp.ge.s32.totalorder %v132, %v134
    %v137 = vadd.s32 %v129, 1
    %v138 = vadd.s32 %v130, 1
    %v139 = vmul.u32 %v137, 8
    %v140 = vmul.u32 %v138, 8
    %vm141 = vcmp.lt.s32.totalorder %v132, %v139
    %vm142 = vcmp.lt.s32.totalorder %v132, %v140
    %vm143 = vmand %vm135, %vm141
    %vm144 = vmand %vm136, %vm142
    %v145 = vsel %vm143, 1, 0
    %v146 = vsel %vm144, 1, 0
    %v147 = vcvt.s32.f32 %v145
    %v148 = vcvt.s32.f32 %v146
    %vm149 = vcmask 130048
    %v151 = vsel %vm149, %v126, 0
    %v154 = vsel %vm149, %v127, 0
    %156 = vmatprep.subr.mxu0 0.0
    %157 = vmatpush1.msra.mxu0 0.0
    %158 = vmatprep.subr.mxu0 0.0
    %159 = vmatpush1.msra.mxu0 0.0
    %160 = vmatprep.subr.mxu0 0.0
    %161 = vmatpush1.msra.mxu0 0.0
    %162 = vmatprep.subr.mxu0 0.0
    %163 = vmatpush1.msra.mxu0 0.0
    %164 = vmatprep.subr.mxu0 0.0
    %165 = vmatpush1.msra.mxu0 0.0
    %166 = vmatprep.subr.mxu0 0.0
    %167 = vmatpush1.msra.mxu0 0.0
    %168 = vmatprep.subr.mxu0 0.0
    %169 = vmatpush1.msra.mxu0 0.0
    %170 = vmatprep.subr.mxu0 0.0
    %171 = vmatpush1.msra.mxu0 0.0
    %172 = vmatprep.subr.mxu0 0.0
    %173 = vmatpush1.msra.mxu0 0.0
    %174 = vmatprep.subr.mxu0 0.0
    %175 = vmatpush1.msra.mxu0 0.0
    %176 = vmatprep.subr.mxu0 0.0
    %177 = vmatpush1.msra.mxu0 0.0
    %178 = vmatprep.subr.mxu0 0.0
    %179 = vmatpush1.msra.mxu0 0.0
    %180 = vmatprep.subr.mxu0 0.0
    %181 = vmatpush1.msra.mxu0 0.0
    %182 = vmatprep.subr.mxu0 0.0
    %183 = vmatpush1.msra.mxu0 0.0
    %184 = vmatprep.subr.mxu0 0.0
    %185 = vmatpush1.msra.mxu0 %v148
    %186 = vmatprep.subr.mxu0 0.0
    %187 = vmatpush1.msra.mxu0 %v147
    %188 = vmatprep.subr.mxu0 0.0
    %189 = vmatpush2.msra.mxu0 0.0
    %190 = vmatprep.subr.mxu0 0.0
    %191 = vmatpush2.msra.mxu0 0.0
    %192 = vmatprep.subr.mxu0 0.0
    %193 = vmatpush2.msra.mxu0 0.0
    %194 = vmatprep.subr.mxu0 0.0
    %195 = vmatpush2.msra.mxu0 0.0
    %196 = vmatprep.subr.mxu0 0.0
    %197 = vmatpush2.msra.mxu0 0.0
    %198 = vmatprep.subr.mxu0 0.0
    %199 = vmatpush2.msra.mxu0 0.0
    %200 = vmatprep.subr.mxu0 0.0
    %201 = vmatpush2.msra.mxu0 0.0
    %202 = vmatprep.subr.mxu0 0.0
    %203 = vmatpush2.msra.mxu0 0.0
    %204 = vmatprep.subr.mxu0 0.0
    %205 = vmatpush2.msra.mxu0 0.0
    %206 = vmatprep.subr.mxu0 0.0
    %207 = vmatpush2.msra.mxu0 0.0
    %208 = vmatprep.subr.mxu0 0.0
    %209 = vmatpush2.msra.mxu0 0.0
    %210 = vmatprep.subr.mxu0 0.0
    %211 = vmatpush2.msra.mxu0 0.0
    %212 = vmatprep.subr.mxu0 0.0
    %213 = vmatpush2.msra.mxu0 0.0
    %214 = vmatprep.subr.mxu0 0.0
    %215 = vmatpush2.msra.mxu0 0.0
    %216 = vmatprep.subr.mxu0 0.0
    %217 = vmatpush2.msra.mxu0 0.0
    %218 = vmatprep.subr.mxu0 0.0
    %219 = vmatpush2.msra.mxu0 0.0
    %220 = vmatprep.mubr.f32.mxu0 0.0
    %221 = vmatmul.mubr.f32.gmra.mxu0 %v151
    %v222 = vpop.f32.mrf.mxu0
    %v223 = vadd.f32 0.0, %v222
    %v224 = vpop.f32.mrf.mxu0
    %225 = vmatprep.mubr.f32.mxu0 0.0
    %226 = vmatmul.mubr.f32.gmra.mxu0 %v154
    %v227 = vpop.f32.mrf.mxu0
    %v228 = vadd.f32 0.0, %v227
    %v229 = vpop.f32.mrf.mxu0
    %230 = vdwg.mxu0
    %v231 = vmul.f32 %v124, %v223
    %v232 = vmul.f32 %v125, %v228
    %233 = vst [vmem:[#allocation8] sm:$0xff] %v231
    %234 = vst [vmem:[#allocation8 + $0x8] sm:$0xff] %v232
    // Predicated region
    $region26: #{tpu_custom_call.1} parent=1 // pred_check
      _
    $region27: #{tpu_custom_call.1} parent=1 // pred_check_branch
      %236 = sbr.rel (0) target = $region29
    $region28: #{tpu_custom_call.1} parent=1 // pred_region
      %s238 = ssub.s32 256, 256
      %239 = vsyncadd [#allocation4], %s238
      %s240 = sshll.u32 [#allocation8], 4
      %s241 = int_to_ptr.vmem [resolvable:$true] %s240
      %246 = dma.vmem_to_hbm [thread:$0]  %s241, 256, %s3, [#allocation4], 128, 128, 8
    $region29: #{tpu_custom_call.1} parent=1 // pred_fallthru
      _
    // Predicated region
    $region30: #{tpu_custom_call.1} parent=1 // pred_check
      _
    $region31: #{tpu_custom_call.1} parent=1 // pred_check_branch
      %248 = sbr.rel (0) target = $region33
    $region32: #{tpu_custom_call.1} parent=1 // pred_region
      %249 = dma.done [#allocation4], 256
    $region33: #{tpu_custom_call.1} parent=1 // pred_fallthru
      _
    %250 = vsyncpa [#allocation3], 1
    %251 = vsyncpa [#allocation6], 1
    %252 = vsyncpa [#allocation4], 1

</llo_original>
